<compile_context>
chip_gen: v5e
topology: v5e:2x2
jax: 0.10.0
libtpu: 0.0.40
codegen_flags: <defaults>
</compile_context>

<pallas_src>
import functools
import math

import jax
import jax.numpy as jnp
from jax import lax
from jax.experimental import pallas as pl
from jax.experimental.pallas import tpu as pltpu


def _rmsnorm_kernel(x_ref, w_ref, o_ref, *, eps: float, inv_d: float):
    # f32 math matches torch: x.to(float32) -> normalize -> * weight -> cast back.
    x = x_ref[...].astype(jnp.float32)                    # (tile_rows, d_pad)
    # sum * (1/d_model) instead of mean: stays correct when the lane axis is
    # zero-padded up to a multiple of 128.
    ms = jnp.sum(x * x, axis=-1, keepdims=True) * inv_d   # (tile_rows, 1)
    inv = lax.rsqrt(ms + eps)                             # EUP rsqrt, VALU has slack
    w = w_ref[...].astype(jnp.float32)                    # (1, d_pad), resident block
    o_ref[...] = ((x * inv) * w).astype(o_ref.dtype)


def _round_up(v: int, m: int) -> int:
    return ((v + m - 1) // m) * m


# ~2-8 MiB input tiles are needed to amortize the ~0.35 us per-grid-step
# pipeline overhead; 4 MiB sits in the measured sweet spot.
_TARGET_TILE_BYTES = 4 * 1024 * 1024


def _pick_tile_rows(rows: int, d_pad: int, itemsize: int,
                    vmem_budget_bytes: int) -> int:
    """Largest sublane-aligned row tile: bytes-targeted, then VMEM-clamped."""
    sub = max(8, 32 // itemsize)   # sublane packing: f32 -> 8, bf16 -> 16, int8 -> 32
    # Bytes-based cap: input tile ~= _TARGET_TILE_BYTES.
    tr_bytes = max(sub, _TARGET_TILE_BYTES // (d_pad * itemsize))
    # Per-row VMEM for one pipelined step: double-buffered input + output tiles
    # plus ~3 full-tile f32 temporaries materialized inside the body.
    per_row = 2 * 2 * d_pad * itemsize + 3 * d_pad * 4
    tr_vmem = max(sub, vmem_budget_bytes // per_row)
    tr = min(tr_bytes, tr_vmem)
    tr = min(tr, _round_up(rows, sub))    # don't pad far beyond the real row count
    tr = max(sub, (tr // sub) * sub)      # sublane-aligned
    return tr


def _device_kind() -> str:
    try:
        return jax.devices()[0].device_kind.lower()
    except Exception:
        return ""


def _vmem_capacity_bytes() -> int:
    try:
        return int(pltpu.get_tpu_info().vmem_capacity_bytes)
    except Exception:
        kind = _device_kind()
        if "v7" in kind or "7x" in kind:
            return 64 * 1024 * 1024       # v7x: 64 MiB per TensorCore
        return 128 * 1024 * 1024          # v4/v5e/v6e: 128 MiB


def rmsnorm(x: jax.Array, weight: jax.Array, eps: float = 1e-5,
            tile_rows: int | None = None) -> jax.Array:
    """RMSNorm over the last axis of x, scaled by weight (shape (d_model,))."""
    orig_shape = x.shape
    d_model = orig_shape[-1]
    assert weight.shape == (d_model,)

    rows = math.prod(orig_shape[:-1]) if len(orig_shape) > 1 else 1
    # Lane-dense stores: pad the feature axis to a multiple of 128 (masked
    # vst.msk partial stores are ~4.5x worse than unmasked vst), slice after.
    d_pad = _round_up(d_model, 128)

    x2d = x.reshape(rows, d_model)
    w2d = weight.reshape(1, d_model)
    if d_pad != d_model:
        x2d = jnp.pad(x2d, ((0, 0), (0, d_pad - d_model)))
        w2d = jnp.pad(w2d, ((0, 0), (0, d_pad - d_model)))

    vmem_cap = _vmem_capacity_bytes()
    vmem_budget = vmem_cap // 2           # tile-sizing budget (conservative)
    vmem_limit = (vmem_cap * 3) // 4      # compiler headroom above the budget

    tr = tile_rows if tile_rows is not None else _pick_tile_rows(
        rows, d_pad, x.dtype.itemsize, vmem_budget)

    # Megacore: on v7x (2 TCs sharing HBM) shard the row axis across cores;
    # on single-TC parts keep "parallel" (no-op, but harmless).
    kind = _device_kind()
    if "v7" in kind or "7x" in kind:
        dim_sem = (pltpu.CORE_PARALLEL,)
    else:
        dim_sem = ("parallel",)

    # Ragged last block handled by Pallas (masked stores); the reduction axis
    # (d_pad) is fully resident so no masking is needed inside the kernel.
    grid = (pl.cdiv(rows, tr),)

    out = pl.pallas_call(
        functools.partial(_rmsnorm_kernel, eps=eps, inv_d=1.0 / d_model),
        out_shape=jax.ShapeDtypeStruct((rows, d_pad), x.dtype),
        grid_spec=pltpu.PrefetchScalarGridSpec(
            num_scalar_prefetch=0,
            grid=grid,
            in_specs=[
                pl.BlockSpec((tr, d_pad), lambda i: (i, 0)),   # x row tile
                pl.BlockSpec((1, d_pad), lambda i: (0, 0)),    # weight (resident)
            ],
            out_specs=pl.BlockSpec((tr, d_pad), lambda i: (i, 0)),
        ),
        compiler_params=pltpu.CompilerParams(
            dimension_semantics=dim_sem,
            vmem_limit_bytes=vmem_limit,
        ),
    )(x2d, w2d)

    if d_pad != d_model:
        out = out[:, :d_model]
    return out.reshape(orig_shape)


if __name__ == "__main__":
    eps = 1e-5

    def ref_rmsnorm(x, w, eps):
        xf = x.astype(jnp.float32)
        norm = jnp.sqrt(jnp.mean(xf * xf, axis=-1, keepdims=True) + eps)
        return ((xf / norm) * w.astype(jnp.float32)).astype(x.dtype)

    # Case 1: small f32 input, lane-dense d_model (multiple of 128).
    key = jax.random.PRNGKey(0)
    batch, seq, d_model = 2, 8, 128
    x = jax.random.normal(key, (batch, seq, d_model), dtype=jnp.float32)
    weight = jnp.ones((d_model,), dtype=jnp.float32)   # matches torch.ones init
    out = rmsnorm(x, weight, eps=eps)
    jax.block_until_ready(out)
    ref = ref_rmsnorm(x, weight, eps)
    assert out.shape == x.shape and out.dtype == x.dtype
    assert jnp.allclose(out, ref, atol=1e-5, rtol=1e-5)

    # Case 2: bf16 input, row count (3*7=21) not a multiple of the tile
    # -> exercises the pl.cdiv ragged last-block path.
    x_bf = jax.random.normal(jax.random.PRNGKey(1), (3, 7, 128), dtype=jnp.bfloat16)
    w_bf = jnp.ones((128,), dtype=jnp.float32) + 0.1 * jnp.arange(128, dtype=jnp.float32)
    out_bf = rmsnorm(x_bf, w_bf, eps=eps, tile_rows=16)
    jax.block_until_ready(out_bf)
    ref_bf = ref_rmsnorm(x_bf, w_bf, eps)
    assert out_bf.shape == x_bf.shape and out_bf.dtype == x_bf.dtype
    assert jnp.allclose(out_bf.astype(jnp.float32), ref_bf.astype(jnp.float32),
                        atol=3e-2, rtol=3e-2)

    # Case 3: d_model not a multiple of 128 -> exercises the lane-pad + slice path.
    x_odd = jax.random.normal(jax.random.PRNGKey(2), (2, 5, 96), dtype=jnp.float32)
    w_odd = 1.0 + 0.01 * jnp.arange(96, dtype=jnp.float32)
    out_odd = rmsnorm(x_odd, w_odd, eps=eps, tile_rows=8)
    jax.block_until_ready(out_odd)
    ref_odd = ref_rmsnorm(x_odd, w_odd, eps)
    assert out_odd.shape == x_odd.shape and out_odd.dtype == x_odd.dtype
    assert jnp.allclose(out_odd, ref_odd, atol=1e-5, rtol=1e-5)

    print("KERNEL_OK")
</pallas_src>

<mosaic_0001>
module attributes {stable_mosaic.version = 11 : i64} {
  func.func @_rmsnorm_kernel(%arg0: i32, %arg1: memref<16x128xf32, #tpu.memory_space<vmem>>, %arg2: memref<1x128xf32, #tpu.memory_space<vmem>>, %arg3: memref<16x128xf32, #tpu.memory_space<vmem>>) attributes {dimension_semantics = [#tpu.dimension_semantics<parallel>], iteration_bounds = array<i64: 1>, scalar_prefetch = 0 : i64, scratch_operands = 0 : i64, tpu.core_type = #tpu.core_type<tc>, window_params = [{transform_indices = @transform_0, window_bounds = array<i64: 16, 128>}, {pipeline_mode = #tpu.pipeline_mode<synchronous>, transform_indices = @transform_1, window_bounds = array<i64: 1, 128>}, {transform_indices = @transform_2, window_bounds = array<i64: 16, 128>}]} {
    %c0 = arith.constant 0 : index
    %c0_0 = arith.constant 0 : index
    %0 = vector.load %arg1[%c0, %c0_0] : memref<16x128xf32, #tpu.memory_space<vmem>>, vector<16x128xf32>
    %1 = arith.mulf %0, %0 : vector<16x128xf32>
    %cst = arith.constant dense<0.000000e+00> : vector<16xf32>
    %2 = vector.multi_reduction <add>, %1, %cst [1] : vector<16x128xf32> to vector<16xf32>
    %3 = vector.shape_cast %2 : vector<16xf32> to vector<16x1xf32>
    %cst_1 = arith.constant 7.812500e-03 : f32
    %4 = vector.broadcast %cst_1 : f32 to vector<16x1xf32>
    %5 = arith.mulf %3, %4 : vector<16x1xf32>
    %cst_2 = arith.constant 9.99999974E-6 : f32
    %6 = vector.broadcast %cst_2 : f32 to vector<16x1xf32>
    %7 = arith.addf %5, %6 : vector<16x1xf32>
    %8 = math.rsqrt %7 : vector<16x1xf32>
    %c0_3 = arith.constant 0 : index
    %c0_4 = arith.constant 0 : index
    %9 = vector.load %arg2[%c0_3, %c0_4] : memref<1x128xf32, #tpu.memory_space<vmem>>, vector<1x128xf32>
    %10 = vector.broadcast %8 : vector<16x1xf32> to vector<16x128xf32>
    %11 = arith.mulf %0, %10 : vector<16x128xf32>
    %12 = vector.broadcast %9 : vector<1x128xf32> to vector<16x128xf32>
    %13 = arith.mulf %11, %12 : vector<16x128xf32>
    %c0_5 = arith.constant 0 : index
    %c0_6 = arith.constant 0 : index
    %14 = vector.load %arg3[%c0_5, %c0_6] : memref<16x128xf32, #tpu.memory_space<vmem>>, vector<16x128xf32>
    tpu.vector_store %arg3[%c0_5, %c0_6], %13 {strides = array<i32>} : memref<16x128xf32, #tpu.memory_space<vmem>>, vector<16x128xf32>,
    return
  }
  func.func @transform_0(%arg0: i32) -> (i32, i32) {
    %c0_i32 = arith.constant 0 : i32
    %c0_i32_0 = arith.constant 0 : i32
    return %arg0, %c0_i32 : i32, i32
  }
  func.func @transform_1(%arg0: i32) -> (i32, i32) {
    %c0_i32 = arith.constant 0 : i32
    %c0_i32_0 = arith.constant 0 : i32
    %c0_i32_1 = arith.constant 0 : i32
    return %c0_i32, %c0_i32_0 : i32, i32
  }
  func.func @transform_2(%arg0: i32) -> (i32, i32) {
    %c0_i32 = arith.constant 0 : i32
    %c0_i32_0 = arith.constant 0 : i32
    return %arg0, %c0_i32 : i32, i32
  }
}

</mosaic_0001>

<llo_original>
// kernel: tpu_custom_call.1
$region0: #{tpu_custom_call.1}
  #allocation0 [shape = 'u32[]', space=smem, size = 0x4, offset = 0x4, fixed_abs, tag = 'smem constant byte address 0x4 - core index']
  #allocation1 [shape = 'u32[72,128]{1,0:T(1,128)}', space=vmem, size = 0x9000, scoped, tag = 'internal scratch']
  %s0 = inlined_call_operand.hbm [shape: f32[16,128], index: 0, kind: input, shape index: {}]
  %s1 = inlined_call_operand.hbm [shape: f32[1,128], index: 1, kind: input, shape index: {}]
  %s2 = inlined_call_operand.hbm [shape: f32[16,128], index: 2, kind: output, shape index: {}]
  %s3 = sld [smem:[#allocation0]]
  $region26: #{tpu_custom_call.1} parent=0
    _
  %s5 = ssub.s32 1, %s3
  %s6 = scalar_select 0, %s5, %s3
  $region1: #{tpu_custom_call.1} parent=0
    #allocation2 [shape = 'u8[8192]{0}', space=vmem, size = 0x2000, scoped, tag = 'input window, operand 0, single buffered']
    #allocation3 [shape = 's32[1]{0}', space=sflag, size = 0x4, scoped, tag = 'scoped memory for tpu_custom_call.1']
    #allocation4 [shape = 's32[1]{0}', space=sflag, size = 0x4, scoped, tag = 'scoped memory for tpu_custom_call.1']
    #allocation5 [shape = 'u8[512]{0}', space=vmem, size = 0x400, scoped, tag = 'input window, operand 1, single buffered']
    #allocation6 [shape = 's32[1]{0}', space=sflag, size = 0x4, scoped, tag = 'scoped memory for tpu_custom_call.1']
    #allocation7 [shape = 'u8[8192]{0}', space=vmem, size = 0x2000, scoped, tag = 'output window, operand 0, single buffered']
    %7 = vsyncpa [#allocation3], 0
    %8 = vsyncpa [#allocation6], 0
    %9 = vsyncpa [#allocation4], 0
    // Predicated region
    $region2: #{tpu_custom_call.1} parent=1 // pred_check
      _
    $region3: #{tpu_custom_call.1} parent=1 // pred_check_branch
      %11 = sbr.rel (0) target = $region5
    $region4: #{tpu_custom_call.1} parent=1 // pred_region
      %13 = vsyncadd [#allocation3], 0
      %s14 = sshll.u32 %s0, 4
      %s15 = int_to_ptr.hbm [resolvable:$true] %s14
      %s16 = sshll.u32 [#allocation2], 4
      %s17 = int_to_ptr.vmem [resolvable:$true] %s16
      %22 = dma.hbm_to_vmem [thread:$0]  %s15, 256, %s17, [#allocation3], 128, 128, 8
    $region5: #{tpu_custom_call.1} parent=1 // pred_fallthru
      _
    // Predicated region
    $region6: #{tpu_custom_call.1} parent=1 // pred_check
      _
    $region7: #{tpu_custom_call.1} parent=1 // pred_check_branch
      %24 = sbr.rel (0) target = $region9
    $region8: #{tpu_custom_call.1} parent=1 // pred_region
      %26 = vsyncadd [#allocation6], 0
      %s28 = sshll.u32 %s1, 4
      %s29 = int_to_ptr.hbm [resolvable:$true] %s28
      %s30 = sshll.u32 [#allocation5], 4
      %s31 = int_to_ptr.vmem [resolvable:$true] %s30
      %33 = dma.hbm_to_vmem [thread:$0]  %s29, 16, %s31, [#allocation6]
    $region9: #{tpu_custom_call.1} parent=1 // pred_fallthru
      _
    // Predicated region
    $region10: #{tpu_custom_call.1} parent=1 // pred_check
      _
    $region11: #{tpu_custom_call.1} parent=1 // pred_check_branch
      %35 = sbr.rel (0) target = $region13
    $region12: #{tpu_custom_call.1} parent=1 // pred_region
      %37 = dma.done [#allocation3], 256
    $region13: #{tpu_custom_call.1} parent=1 // pred_fallthru
      _
    // Predicated region
    $region14: #{tpu_custom_call.1} parent=1 // pred_check
      _
    $region15: #{tpu_custom_call.1} parent=1 // pred_check_branch
      %39 = sbr.rel (0) target = $region17
    $region16: #{tpu_custom_call.1} parent=1 // pred_region
      %41 = dma.done [#allocation6], 16
    $region17: #{tpu_custom_call.1} parent=1 // pred_fallthru
      _
    %v42 = vld [vmem:[#allocation2] sm:$0xff]
    %v43 = vld [vmem:[#allocation2 + $0x8] sm:$0xff]
    %v44 = vmul.f32 %v42, %v42
    %v45 = vmul.f32 %v43, %v43
    %46 = vadd.xlane.f32.xlu0 %v44
    %v47 = vpop.xlane.xlu0 %46
    %48 = vadd.xlane.f32.xlu0 %v45
    %v49 = vpop.xlane.xlu0 %48
    %v50 = vmul.f32 %v47, 0.0078125
    %v51 = vmul.f32 %v49, 0.0078125
    %v52 = vadd.f32 %v50, 1e-05
    %v53 = vadd.f32 %v51, 1e-05
    %v54 = vrsqrt.pop %v52
    %v55 = vmul.f32 %v54, %v52
    %v56 = vmul.f32 %v55, %v54
    %v57 = vmul.f32 0.5, %v56
    %v58 = vsub.f32 1.5, %v57
    %v59 = vmul.f32 %v54, %v58
    %vm60 = vweird.f32 %v52
    %vm61 = vweird.f32 %v54
    %vm62 = vmor %vm60, %vm61
    %v63 = vsel %vm62, %v54, %v59
    %v64 = vrsqrt.pop %v53
    %v65 = vmul.f32 %v64, %v53
    %v66 = vmul.f32 %v65, %v64
    %v67 = vmul.f32 0.5, %v66
    %v68 = vsub.f32 1.5, %v67
    %v69 = vmul.f32 %v64, %v68
    %vm70 = vweird.f32 %v53
    %vm71 = vweird.f32 %v64
    %vm72 = vmor %vm70, %vm71
    %v73 = vsel %vm72, %v64, %v69
    %v74 = vld [vmem:[#allocation5] sm:$0x1]
    %v75 = vmul.f32 %v42, %v63
    %v76 = vmul.f32 %v43, %v73
    %v78 = vperm.slane %v74, 0
    %v80 = vmul.f32 %v75, %v78
    %v81 = vmul.f32 %v76, %v78
    %82 = vst [vmem:[#allocation7] sm:$0xff] %v80
    %83 = vst [vmem:[#allocation7 + $0x8] sm:$0xff] %v81
    // Predicated region
    $region18: #{tpu_custom_call.1} parent=1 // pred_check
      _
    $region19: #{tpu_custom_call.1} parent=1 // pred_check_branch
      %85 = sbr.rel (0) target = $region21
    $region20: #{tpu_custom_call.1} parent=1 // pred_region
      %87 = vsyncadd [#allocation4], 0
      %s88 = sshll.u32 [#allocation7], 4
      %s89 = int_to_ptr.vmem [resolvable:$true] %s88
      %s90 = sshll.u32 %s2, 4
      %s91 = int_to_ptr.hbm [resolvable:$true] %s90
      %96 = dma.vmem_to_hbm [thread:$0]  %s89, 256, %s91, [#allocation4], 128, 128, 8
    $region21: #{tpu_custom_call.1} parent=1 // pred_fallthru
      _
    // Predicated region
    $region22: #{tpu_custom_call.1} parent=1 // pred_check
      _
    $region23: #{tpu_custom_call.1} parent=1 // pred_check_branch
      %98 = sbr.rel (0) target = $region25
    $region24: #{tpu_custom_call.1} parent=1 // pred_region
      %100 = dma.done [#allocation4], 256
    $region25: #{tpu_custom_call.1} parent=1 // pred_fallthru
      _
    %101 = vsyncpa [#allocation3], 1
    %102 = vsyncpa [#allocation6], 1
    %103 = vsyncpa [#allocation4], 1

</llo_original>
